<compile_context>
chip_gen: v6e
topology: v6e:2x2x1
jax: 0.10.0
libtpu: 0.0.40
codegen_flags: <defaults>
</compile_context>

<pallas_src>
import jax
import jax.numpy as jnp
from jax.experimental import pallas as pl
from jax.experimental.pallas import tpu as pltpu


def _round_up(x, m):
    return -(-x // m) * m


def _spatial_attention_kernel(w_ref, b_ref, x_ref, o_ref):
    # w_ref: (1, C, 1) VMEM, resident across the whole grid (constant index_map)
    # b_ref: (1, 1)    SMEM, f32 conv bias
    # x_ref: (NB, C, T) VMEM block   (T = spatial tile, multiple of 128 lanes)
    # o_ref: (NB, C, T) VMEM block
    x = x_ref[...]
    w = w_ref[...].astype(jnp.float32)       # (1, C, 1), broadcasts over NB and T
    b = b_ref[0, 0]                          # f32 scalar
    # 1x1 conv over channels -> per-pixel scalar gate, f32 accumulation.
    gate = jnp.sum(x.astype(jnp.float32) * w, axis=1, keepdims=True) + b  # (NB,1,T)
    # torch.mul(x, activation): broadcast the gate back over channels.
    o_ref[...] = x * gate.astype(x.dtype)


def _choose_blocking(N, C, HW, itemsize, max_block_bytes=2 * 1024 * 1024):
    """Pick (NB, HW_TILE, N_pad, HW_pad).

    Per grid step Pallas double-buffers the x tile and the out tile, i.e.
    ~4 * block_bytes live in VMEM.  Capping each block at 2 MiB keeps that
    under 8 MiB -- well inside even v5e's 16 MiB default scoped VMEM -- while
    still being large enough (>=0.5 MiB typical) to sit near the HBM roofline
    and amortize the ~0.35 us fixed per-step overhead.
    """
    hw_pad = _round_up(HW, 128)
    # Largest lane-dense spatial tile within the per-block byte budget.
    max_t = max(128, (max_block_bytes // max(C * itemsize, 1)) // 128 * 128)
    t = min(hw_pad, max_t)
    hw_pad = _round_up(HW, t)                # spatial axis tiles the grid evenly
    # For small feature maps (whole H*W in one tile), batch several samples per
    # grid step to amortize fixed per-step overhead and enlarge each DMA.
    nb = 1
    if t >= hw_pad:
        while nb < N and 2 * nb * C * t * itemsize <= max_block_bytes:
            nb *= 2
        nb = min(nb, N)
    n_pad = _round_up(N, nb)
    return nb, t, n_pad, hw_pad


def spatial_attention(x_nchw, weight, bias):
    """x_nchw: (N, C, H, W); weight: (1, C, 1, 1); bias: (1,)."""
    N, C, H, W = x_nchw.shape
    HW = H * W
    itemsize = jnp.dtype(x_nchw.dtype).itemsize

    nb, t, n_pad, hw_pad = _choose_blocking(N, C, HW, itemsize)

    x_flat = x_nchw.reshape(N, C, HW)
    if n_pad != N or hw_pad != HW:
        x_flat = jnp.pad(x_flat, ((0, n_pad - N), (0, 0), (0, hw_pad - HW)))

    w3d = weight.reshape(1, C, 1).astype(x_nchw.dtype)    # C on sublanes
    b2d = bias.reshape(1, 1).astype(jnp.float32)          # f32 scalar in SMEM

    grid = (n_pad // nb, hw_pad // t)

    out_flat = pl.pallas_call(
        _spatial_attention_kernel,
        out_shape=jax.ShapeDtypeStruct((n_pad, C, hw_pad), x_nchw.dtype),
        grid_spec=pltpu.PrefetchScalarGridSpec(
            num_scalar_prefetch=0,
            grid=grid,
            in_specs=[
                pl.BlockSpec((1, C, 1), lambda n, s: (0, 0, 0)),    # weight (resident)
                pl.BlockSpec(memory_space=pltpu.SMEM),              # bias scalar
                pl.BlockSpec((nb, C, t), lambda n, s: (n, 0, s)),   # x tile
            ],
            out_specs=pl.BlockSpec((nb, C, t), lambda n, s: (n, 0, s)),
        ),
        compiler_params=pltpu.CompilerParams(
            dimension_semantics=("parallel", "parallel"),
            vmem_limit_bytes=32 * 1024 * 1024,
        ),
    )(w3d, b2d, x_flat)

    out_flat = out_flat[:N, :, :HW]
    return out_flat.reshape(N, C, H, W)


if __name__ == "__main__":
    key = jax.random.PRNGKey(0)
    k_x, k_w, k_b = jax.random.split(key, 3)

    N, C, H, W = 2, 4, 16, 16
    x = jax.random.normal(k_x, (N, C, H, W), dtype=jnp.float32)

    # Deterministic synthetic parameters for Conv2d(C, 1, kernel_size=1)
    weight = jax.random.normal(k_w, (1, C, 1, 1), dtype=jnp.float32) * 0.1
    bias = jax.random.normal(k_b, (1,), dtype=jnp.float32) * 0.1

    out = spatial_attention(x, weight, bias)
    out = jax.block_until_ready(out)

    # Pure-JAX reference (1x1 conv == channel contraction + bias, then gate mul)
    act_ref = jnp.einsum("nchw,c->nhw", x, weight.reshape(C)) + bias[0]
    ref = x * act_ref[:, None, :, :]
    assert jnp.allclose(out, ref, atol=1e-5, rtol=1e-5), "mismatch vs reference"

    print("KERNEL_OK")
</pallas_src>

<mosaic_0001>
module attributes {stable_mosaic.version = 11 : i64} {
  func.func @_spatial_attention_kernel(%arg0: i32, %arg1: i32, %arg2: memref<1x4x1xf32, #tpu.memory_space<vmem>>, %arg3: memref<1x1xf32, #tpu.memory_space<smem>>, %arg4: memref<2x4x256xf32, #tpu.memory_space<vmem>>, %arg5: memref<2x4x256xf32, #tpu.memory_space<vmem>>) attributes {dimension_semantics = [#tpu.dimension_semantics<parallel>, #tpu.dimension_semantics<parallel>], iteration_bounds = array<i64: 1, 1>, scalar_prefetch = 0 : i64, scratch_operands = 0 : i64, tpu.core_type = #tpu.core_type<tc>, window_params = [{pipeline_mode = #tpu.pipeline_mode<synchronous>, transform_indices = @transform_0, window_bounds = array<i64: 1, 4, 1>}, {transform_indices = @transform_1, window_bounds = array<i64: 1, 1>}, {transform_indices = @transform_2, window_bounds = array<i64: 2, 4, 256>}, {transform_indices = @transform_3, window_bounds = array<i64: 2, 4, 256>}]} {
    %c0 = arith.constant 0 : index
    %c0_0 = arith.constant 0 : index
    %c0_1 = arith.constant 0 : index
    %0 = vector.load %arg4[%c0, %c0_0, %c0_1] : memref<2x4x256xf32, #tpu.memory_space<vmem>>, vector<2x4x256xf32>
    %c0_2 = arith.constant 0 : index
    %c0_3 = arith.constant 0 : index
    %c0_4 = arith.constant 0 : index
    %1 = vector.load %arg2[%c0_2, %c0_3, %c0_4] : memref<1x4x1xf32, #tpu.memory_space<vmem>>, vector<1x4x1xf32>
    %c0_5 = arith.constant 0 : index
    %c0_6 = arith.constant 0 : index
    %2 = memref.load %arg3[%c0_5, %c0_6] : memref<1x1xf32, #tpu.memory_space<smem>>
    %3 = vector.broadcast %1 : vector<1x4x1xf32> to vector<2x4x256xf32>
    %4 = arith.mulf %0, %3 : vector<2x4x256xf32>
    %cst = arith.constant dense<0.000000e+00> : vector<2x256xf32>
    %5 = vector.multi_reduction <add>, %4, %cst [1] : vector<2x4x256xf32> to vector<2x256xf32>
    %6 = vector.shape_cast %5 : vector<2x256xf32> to vector<2x1x256xf32>
    %7 = vector.broadcast %2 : f32 to vector<2x1x256xf32>
    %8 = arith.addf %6, %7 : vector<2x1x256xf32>
    %9 = vector.broadcast %8 : vector<2x1x256xf32> to vector<2x4x256xf32>
    %10 = arith.mulf %0, %9 : vector<2x4x256xf32>
    %c0_7 = arith.constant 0 : index
    %c0_8 = arith.constant 0 : index
    %c0_9 = arith.constant 0 : index
    %11 = vector.load %arg5[%c0_7, %c0_8, %c0_9] : memref<2x4x256xf32, #tpu.memory_space<vmem>>, vector<2x4x256xf32>
    tpu.vector_store %arg5[%c0_7, %c0_8, %c0_9], %10 {strides = array<i32>} : memref<2x4x256xf32, #tpu.memory_space<vmem>>, vector<2x4x256xf32>,
    return
  }
  func.func @transform_0(%arg0: i32, %arg1: i32) -> (i32, i32, i32) {
    %c0_i32 = arith.constant 0 : i32
    %c0_i32_0 = arith.constant 0 : i32
    %c0_i32_1 = arith.constant 0 : i32
    %c0_i32_2 = arith.constant 0 : i32
    return %c0_i32, %c0_i32_0, %c0_i32_1 : i32, i32, i32
  }
  func.func @transform_1(%arg0: i32, %arg1: i32) -> (i32, i32) {
    %c0_i32 = arith.constant 0 : i32
    %c0_i32_0 = arith.constant 0 : i32
    %c0_i32_1 = arith.constant 0 : i32
    return %c0_i32, %c0_i32_0 : i32, i32
  }
  func.func @transform_2(%arg0: i32, %arg1: i32) -> (i32, i32, i32) {
    %c0_i32 = arith.constant 0 : i32
    %c0_i32_0 = arith.constant 0 : i32
    return %arg0, %c0_i32, %arg1 : i32, i32, i32
  }
  func.func @transform_3(%arg0: i32, %arg1: i32) -> (i32, i32, i32) {
    %c0_i32 = arith.constant 0 : i32
    %c0_i32_0 = arith.constant 0 : i32
    return %arg0, %c0_i32, %arg1 : i32, i32, i32
  }
}

</mosaic_0001>

<llo_original>
// kernel: tpu_custom_call.1
$region0: #{tpu_custom_call.1}
  #allocation0 [shape = 'u32[]', space=smem, size = 0x4, offset = 0x4, fixed_abs, tag = 'smem constant byte address 0x4 - core index']
  #allocation1 [shape = 'u32[144,128]{1,0:T(1,128)}', space=vmem, size = 0x12000, scoped, tag = 'internal scratch']
  #allocation2 [shape = 'f32[1,1]{1,0:T(1,128)S(6)}', space=smem, size = 0x200, scoped, tag = 'scoped memory for tpu_custom_call.1']
  %s0 = inlined_call_operand.vmem [shape: f32[1,4,1], index: 0, kind: input, shape index: {}]
  %s1 = inlined_call_operand.<no memory space> [shape: f32[1,1], index: 1, kind: input, shape index: {}]
  %s2 = inlined_call_operand.hbm [shape: f32[2,4,256], index: 2, kind: input, shape index: {}]
  %s3 = inlined_call_operand.hbm [shape: f32[2,4,256], index: 3, kind: output, shape index: {}]
  %s4 = sld [smem:[#allocation0]]
  $region26: #{tpu_custom_call.1} parent=0
    _
  %s6 = ssub.s32 1, %s4
  %s7 = scalar_select 0, %s6, %s4
  %8 = sst [smem:[#allocation2]] %s1
  $region1: #{tpu_custom_call.1} parent=0
    #allocation3 [shape = 'u8[8192]{0}', space=vmem, size = 0x2000, scoped, tag = 'input window, operand 2, single buffered']
    #allocation4 [shape = 's32[1]{0}', space=sflag, size = 0x4, scoped, tag = 'scoped memory for tpu_custom_call.1']
    #allocation5 [shape = 's32[1]{0}', space=sflag, size = 0x4, scoped, tag = 'scoped memory for tpu_custom_call.1']
    #allocation6 [shape = 'u8[8192]{0}', space=vmem, size = 0x2000, scoped, tag = 'output window, operand 0, single buffered']
    %9 = vsyncpa [#allocation4], 0
    %10 = vsyncpa [#allocation5], 0
    // Predicated region
    $region2: #{tpu_custom_call.1} parent=1 // pred_check
      _
    $region3: #{tpu_custom_call.1} parent=1 // pred_check_branch
      %12 = sbr.rel (0) target = $region5
    $region4: #{tpu_custom_call.1} parent=1 // pred_region
      _
    $region5: #{tpu_custom_call.1} parent=1 // pred_fallthru
      _
    // Predicated region
    $region6: #{tpu_custom_call.1} parent=1 // pred_check
      _
    $region7: #{tpu_custom_call.1} parent=1 // pred_check_branch
      %14 = sbr.rel (0) target = $region9
    $region8: #{tpu_custom_call.1} parent=1 // pred_region
      _
    $region9: #{tpu_custom_call.1} parent=1 // pred_fallthru
      _
    // Predicated region
    $region10: #{tpu_custom_call.1} parent=1 // pred_check
      _
    $region11: #{tpu_custom_call.1} parent=1 // pred_check_branch
      %16 = sbr.rel (0) target = $region13
    $region12: #{tpu_custom_call.1} parent=1 // pred_region
      %s18 = ssub.s32 256, 256
      %19 = vsyncadd [#allocation4], %s18
      %s20 = sshll.u32 [#allocation3], 4
      %s21 = int_to_ptr.vmem [resolvable:$true] %s20
      %26 = dma.hbm_to_vmem [thread:$0]  %s2, 256, %s21, [#allocation4], 128, 128, 8
    $region13: #{tpu_custom_call.1} parent=1 // pred_fallthru
      _
    // Predicated region
    $region14: #{tpu_custom_call.1} parent=1 // pred_check
      _
    $region15: #{tpu_custom_call.1} parent=1 // pred_check_branch
      %28 = sbr.rel (0) target = $region17
    $region16: #{tpu_custom_call.1} parent=1 // pred_region
      %29 = dma.done [#allocation4], 256
    $region17: #{tpu_custom_call.1} parent=1 // pred_fallthru
      _
    %v30 = vld [vmem:[#allocation3] sm:$0xff]
    %v31 = vld [vmem:[#allocation3 + $0x8] sm:$0xff]
    %v32 = vld [vmem:[%s0] sm:$0xf]
    %s33 = sld [smem:[#allocation2]]
    %35 = vset.pattern.permute.xlu0 0
    %36 = vperm.xlu0 %35, %v32
    %v37 = vpop.permute.xlu0 %36
    %v39 = vunpack.c.l.s4 839922192
    %v40 = vunpack.c.0.s8 %v39
    %v41 = vlaneseq
    %v42 = vshrl.u32 %v41, 7
    %v43 = vsub.s32 %v40, %v42
    %v44 = vrot.slane %v37, %v43
    %v46 = vmul.f32 %v30, %v44
    %v47 = vmul.f32 %v31, %v44
    %v50 = vcombine.high %v46, %v46
    %v51 = vcombine.high %v47, %v47
    %vm54 = vcmask 1043456
    %v55 = vsel %vm54, %v46, 0.0
    %v56 = vrot.slane %v55, 4
    %v57 = vadd.f32 %v55, %v56
    %v58 = vrot.slane %v57, 2
    %v59 = vadd.f32 %v57, %v58
    %v60 = vrot.slane %v59, 1
    %v61 = vadd.f32 %v59, %v60
    %v62 = vsel %vm54, %v50, 0.0
    %v63 = vrot.slane %v62, 4
    %v64 = vadd.f32 %v62, %v63
    %v65 = vrot.slane %v64, 2
    %v66 = vadd.f32 %v64, %v65
    %v67 = vrot.slane %v66, 1
    %v68 = vadd.f32 %v66, %v67
    %v69 = vsel %vm54, %v47, 0.0
    %v70 = vrot.slane %v69, 4
    %v71 = vadd.f32 %v69, %v70
    %v72 = vrot.slane %v71, 2
    %v73 = vadd.f32 %v71, %v72
    %v74 = vrot.slane %v73, 1
    %v75 = vadd.f32 %v73, %v74
    %v76 = vsel %vm54, %v51, 0.0
    %v77 = vrot.slane %v76, 4
    %v78 = vadd.f32 %v76, %v77
    %v79 = vrot.slane %v78, 2
    %v80 = vadd.f32 %v78, %v79
    %v81 = vrot.slane %v80, 1
    %v82 = vadd.f32 %v80, %v81
    %v83 = vstv %s33
    %v84 = vadd.f32 %v61, %v83
    %v85 = vadd.f32 %v68, %v83
    %v86 = vadd.f32 %v75, %v83
    %v87 = vadd.f32 %v82, %v83
    %v92 = vcombine.low %v84, %v85
    %v93 = vcombine.low %v86, %v87
    %v96 = vmul.f32 %v30, %v92
    %v97 = vmul.f32 %v31, %v93
    %98 = vst [vmem:[#allocation6] sm:$0xff] %v96
    %99 = vst [vmem:[#allocation6 + $0x8] sm:$0xff] %v97
    // Predicated region
    $region18: #{tpu_custom_call.1} parent=1 // pred_check
      _
    $region19: #{tpu_custom_call.1} parent=1 // pred_check_branch
      %101 = sbr.rel (0) target = $region21
    $region20: #{tpu_custom_call.1} parent=1 // pred_region
      %s103 = ssub.s32 256, 256
      %104 = vsyncadd [#allocation5], %s103
      %s105 = sshll.u32 [#allocation6], 4
      %s106 = int_to_ptr.vmem [resolvable:$true] %s105
      %111 = dma.vmem_to_hbm [thread:$0]  %s106, 256, %s3, [#allocation5], 128, 128, 8
    $region21: #{tpu_custom_call.1} parent=1 // pred_fallthru
      _
    // Predicated region
    $region22: #{tpu_custom_call.1} parent=1 // pred_check
      _
    $region23: #{tpu_custom_call.1} parent=1 // pred_check_branch
      %113 = sbr.rel (0) target = $region25
    $region24: #{tpu_custom_call.1} parent=1 // pred_region
      %114 = dma.done [#allocation5], 256
    $region25: #{tpu_custom_call.1} parent=1 // pred_fallthru
      _
    %115 = vsyncpa [#allocation4], 1
    %116 = vsyncpa [#allocation5], 1

</llo_original>
